<compile_context>
chip_gen: v7x
topology: tpu7x:2x2x1
jax: 0.10.0
libtpu: 0.0.40
codegen_flags: <defaults>
</compile_context>

<pallas_src>
import functools

import jax
import jax.numpy as jnp
from jax import lax
from jax.experimental import pallas as pl
from jax.experimental.pallas import tpu as pltpu


_LANE = 128          # lane width / alignment quantum
_MIN_TK = 512        # tiles >=512 lanes reach ~85%+ of HBM roofline
_MAX_TK = 8192       # keep a few grid steps even with huge VMEM headroom


# --------------------------------------------------------------------------
# helpers
# --------------------------------------------------------------------------
def _round_up(x, m):
    return (x + m - 1) // m * m


def _vmem_budget_bytes():
    """Generation-aware scoped-VMEM budget (v5e/v6e: 128 MiB phys, v7x: 64 MiB)."""
    try:
        cap = int(pltpu.get_tpu_info().vmem_capacity_bytes)
    except Exception:
        cap = 64 * 1024 * 1024  # conservative fallback (v7x-sized)
    return min(cap * 3 // 4, 96 * 1024 * 1024)


def _choose_tiling(M, K, itemsize):
    """Pick (M_pad, K_pad, tk, vmem_limit) for the Gram contraction."""
    M_pad = _round_up(M, _LANE)       # lane-dense Gram accumulator / MXU N dim
    K128 = _round_up(K, _LANE)

    budget = _vmem_budget_bytes()
    # Resident VMEM besides the double-buffered F tiles: f32 Gram accumulator
    # plus the single-buffered f32 target (or output Gram) copy, plus slack.
    fixed = 2 * M_pad * M_pad * 4 + (2 << 20)
    avail = max(budget - fixed, 2 * M_pad * _LANE * itemsize)
    tk_cap = max((avail // (2 * M_pad * itemsize)) // _LANE * _LANE, _LANE)
    tk_cap = min(tk_cap, _MAX_TK)

    # Step count: enough to respect the VMEM cap, and (when K is large enough
    # to keep tiles >= 512 lanes) at least ~4 so the F DMA overlaps the matmul.
    n_k = max(pl.cdiv(K128, tk_cap), min(4, max(K128 // _MIN_TK, 1)))
    tk = _round_up(pl.cdiv(K128, n_k), _LANE)
    n_k = pl.cdiv(K128, tk)
    K_pad = n_k * tk

    need = fixed + 2 * M_pad * tk * itemsize
    vmem_limit = min(max(budget, need), 128 * 1024 * 1024)
    return M_pad, K_pad, tk, vmem_limit


def _prep_features(x, cast_to_bf16=False):
    """NCHW -> zero-padded (M_pad, K_pad) feature matrix + tiling params."""
    a, b, c, d = x.shape
    M, K = a * b, c * d
    f = x.reshape(M, K)                        # keep native dtype (no f32 upcast)
    if cast_to_bf16 and f.dtype == jnp.float32:
        f = f.astype(jnp.bfloat16)             # MXU-native; f32 accumulation below
    itemsize = jnp.dtype(f.dtype).itemsize
    M_pad, K_pad, tk, vmem_limit = _choose_tiling(M, K, itemsize)
    if (M_pad, K_pad) != (M, K):
        # Zero padding contributes zero rows/cols to both Gram matrices,
        # so the loss is unchanged.
        f = jnp.pad(f, ((0, M_pad - M), (0, K_pad - K)))
    return f, M, K, M_pad, K_pad, tk, vmem_limit


def _compiler_params(vmem_limit):
    return pltpu.CompilerParams(
        dimension_semantics=("arbitrary",),    # K is a sequential reduction axis
        vmem_limit_bytes=int(vmem_limit),
    )


# --------------------------------------------------------------------------
# kernels
# --------------------------------------------------------------------------
def _gram_kernel(f_ref, g_ref):
    """Accumulate G += F_k @ F_k^T over the K grid (no explicit transpose)."""
    k = pl.program_id(0)

    @pl.when(k == 0)
    def _():
        g_ref[...] = jnp.zeros_like(g_ref)

    f = f_ref[...]
    g_ref[...] += lax.dot_general(
        f, f,
        dimension_numbers=(((1,), (1,)), ((), ())),
        preferred_element_type=jnp.float32,
    )


def _style_loss_kernel(f_ref, tgt_hbm, loss_ref, acc_ref, tgt_vmem, tgt_sem,
                       *, inv_denom):
    """Gram accumulation in VMEM scratch; target DMA'd once; scalar loss out."""
    k = pl.program_id(0)

    @pl.when(k == 0)
    def _():
        acc_ref[...] = jnp.zeros_like(acc_ref)
        # Single-buffered target fetch, overlapped with the whole K contraction.
        pltpu.make_async_copy(tgt_hbm, tgt_vmem, tgt_sem.at[0]).start()

    f = f_ref[...]
    acc_ref[...] += lax.dot_general(
        f, f,
        dimension_numbers=(((1,), (1,)), ((), ())),
        preferred_element_type=jnp.float32,
    )

    @pl.when(k == pl.num_programs(0) - 1)
    def _():
        pltpu.make_async_copy(tgt_hbm, tgt_vmem, tgt_sem.at[0]).wait()
        diff = acc_ref[...] - tgt_vmem[...]
        loss_ref[0, 0] = jnp.sum(diff * diff) * inv_denom


# --------------------------------------------------------------------------
# wrappers
# --------------------------------------------------------------------------
def _gram_padded(x, cast_to_bf16=False):
    """Padded Gram matrix (M_pad, M_pad) of the NCHW feature tensor."""
    f, M, K, M_pad, K_pad, tk, vmem_limit = _prep_features(x, cast_to_bf16)
    itemsize = jnp.dtype(f.dtype).itemsize
    g = pl.pallas_call(
        _gram_kernel,
        out_shape=jax.ShapeDtypeStruct((M_pad, M_pad), jnp.float32),
        grid=(K_pad // tk,),
        in_specs=[pl.BlockSpec((M_pad, tk), lambda k: (0, k))],
        out_specs=pl.BlockSpec((M_pad, M_pad), lambda k: (0, 0)),
        compiler_params=_compiler_params(vmem_limit),
        cost_estimate=pl.CostEstimate(
            flops=2 * M_pad * M_pad * K_pad,
            transcendentals=0,
            bytes_accessed=M_pad * K_pad * itemsize + M_pad * M_pad * 4,
        ),
    )(f)
    return g, M, M_pad


def gram_matrix(x, cast_to_bf16=False):
    """Pallas equivalent of the PyTorch gram_matrix helper (no normalization)."""
    g, M, _ = _gram_padded(x, cast_to_bf16)
    return g[:M, :M]


class StyleLoss:
    """JAX/Pallas port of the PyTorch StyleLoss module."""

    def __init__(self, target_feature, cast_features_to_bf16=False):
        self._feature_shape = tuple(target_feature.shape)
        self._cast_bf16 = cast_features_to_bf16
        g_pad, M, _ = _gram_padded(target_feature, cast_features_to_bf16)
        self._target_padded = g_pad            # lane-dense, kept in HBM for the kernel
        self.target = g_pad[:M, :M]            # unpadded Gram (PyTorch attr fidelity)
        self.loss = None

    def __call__(self, x):
        a, b, c, d = x.shape
        assert (a, b, c, d) == self._feature_shape, "feature shape mismatch"
        f, M, K, M_pad, K_pad, tk, vmem_limit = _prep_features(x, self._cast_bf16)
        inv_denom = 1.0 / (4.0 * (b ** 2) * c * d)
        itemsize = jnp.dtype(f.dtype).itemsize
        kernel = functools.partial(_style_loss_kernel, inv_denom=inv_denom)

        loss = pl.pallas_call(
            kernel,
            out_shape=jax.ShapeDtypeStruct((1, 1), jnp.float32),
            grid=(K_pad // tk,),
            in_specs=[
                pl.BlockSpec((M_pad, tk), lambda k: (0, k)),   # pipelined F tiles
                pl.BlockSpec(memory_space=pl.ANY),             # target Gram in HBM
            ],
            out_specs=pl.BlockSpec(memory_space=pltpu.MemorySpace.SMEM),
            scratch_shapes=[
                pltpu.VMEM((M_pad, M_pad), jnp.float32),       # Gram accumulator
                pltpu.VMEM((M_pad, M_pad), jnp.float32),       # single-buffered target
                pltpu.SemaphoreType.DMA((1,)),
            ],
            compiler_params=_compiler_params(vmem_limit),
            cost_estimate=pl.CostEstimate(
                flops=2 * M_pad * M_pad * K_pad + 3 * M_pad * M_pad,
                transcendentals=0,
                bytes_accessed=(M_pad * K_pad * itemsize
                                + M_pad * M_pad * 4 + 4),
            ),
        )(f, self._target_padded)

        self.loss = loss[0, 0]
        return x  # forward returns its input unchanged, like the PyTorch module


# TODO(synk): optionally pipeline_mode=pl.Buffered(3) on the F in_spec for v5e
# (plentiful VMEM, lowest HBM BW) once buffer-depth tuning is worth the sweep.


# --------------------------------------------------------------------------
# reference + test
# --------------------------------------------------------------------------
def _reference_loss(x, target_feature):
    """Pure-JAX reference for correctness checking."""
    def gram(t):
        a, b, c, d = t.shape
        f = t.reshape(a * b, c * d).astype(jnp.float32)
        return f @ f.T

    a, b, c, d = x.shape
    g = gram(x)
    tgt = gram(target_feature)
    return jnp.sum((g - tgt) ** 2) / (4.0 * (b ** 2) * c * d)


if __name__ == "__main__":
    key = jax.random.PRNGKey(0)
    k_tgt, k_in = jax.random.split(key)

    # Small NCHW shapes: batch=2, channels=4, spatial=16x16.
    target_feature = jax.random.normal(k_tgt, (2, 4, 16, 16), dtype=jnp.float32)
    x = jax.random.normal(k_in, (2, 4, 16, 16), dtype=jnp.float32)

    # gram_matrix helper check.
    a, b, c, d = x.shape
    f2d = x.reshape(a * b, c * d)
    g_ref = f2d @ f2d.T
    g_pl = jax.block_until_ready(gram_matrix(x))
    assert g_pl.shape == g_ref.shape
    assert jnp.allclose(g_pl, g_ref, rtol=1e-5, atol=1e-4), "gram mismatch"

    # Full module check.
    module = StyleLoss(target_feature)

    # target attribute fidelity check.
    tgt_ref = target_feature.reshape(a * b, c * d)
    tgt_ref = tgt_ref @ tgt_ref.T
    tgt_pl = jax.block_until_ready(module.target)
    assert tgt_pl.shape == tgt_ref.shape
    assert jnp.allclose(tgt_pl, tgt_ref, rtol=1e-5, atol=1e-4), "target gram mismatch"

    out = module(x)
    out = jax.block_until_ready(out)
    loss = jax.block_until_ready(module.loss)

    ref = _reference_loss(x, target_feature)
    assert out.shape == x.shape
    assert jnp.allclose(out, x)
    assert jnp.allclose(loss, ref, rtol=1e-5, atol=1e-5), (loss, ref)

    print("KERNEL_OK")
</pallas_src>

<mosaic_0001>
module attributes {stable_mosaic.version = 11 : i64} {
  func.func @_gram_kernel(%arg0: i32, %arg1: memref<128x256xf32, #tpu.memory_space<vmem>>, %arg2: memref<128x128xf32, #tpu.memory_space<vmem>>) attributes {dimension_semantics = [#tpu.dimension_semantics<arbitrary>], iteration_bounds = array<i64: 1>, scalar_prefetch = 0 : i64, scratch_operands = 0 : i64, tpu.core_type = #tpu.core_type<tc>, window_params = [{transform_indices = @transform_0, window_bounds = array<i64: 128, 256>}, {pipeline_mode = #tpu.pipeline_mode<synchronous>, transform_indices = @transform_1, window_bounds = array<i64: 128, 128>}]} {
    %c0_i32 = arith.constant 0 : i32
    %0 = arith.cmpi eq, %arg0, %c0_i32 : i32
    %1 = arith.extui %0 : i1 to i32
    %c0_i32_0 = arith.constant 0 : i32
    %2 = arith.cmpi ne, %1, %c0_i32_0 : i32
    scf.if %2 {
      %cst_6 = arith.constant 0.000000e+00 : f32
      %8 = vector.broadcast %cst_6 : f32 to vector<128x128xf32>
      %c0_7 = arith.constant 0 : index
      %c0_8 = arith.constant 0 : index
      %9 = vector.load %arg2[%c0_7, %c0_8] : memref<128x128xf32, #tpu.memory_space<vmem>>, vector<128x128xf32>
      tpu.vector_store %arg2[%c0_7, %c0_8], %8 {strides = array<i32>} : memref<128x128xf32, #tpu.memory_space<vmem>>, vector<128x128xf32>,
    } else {
    }
    %c0 = arith.constant 0 : index
    %c0_1 = arith.constant 0 : index
    %3 = vector.load %arg1[%c0, %c0_1] : memref<128x256xf32, #tpu.memory_space<vmem>>, vector<128x256xf32>
    %c0_2 = arith.constant 0 : index
    %c0_3 = arith.constant 0 : index
    %4 = vector.load %arg2[%c0_2, %c0_3] : memref<128x128xf32, #tpu.memory_space<vmem>>, vector<128x128xf32>
    %cst = arith.constant dense<0.000000e+00> : vector<128x128xf32>
    %5 = tpu.matmul %3, %3, %cst {dimension_numbers = #tpu.dot_dimension_numbers<[1], [1], [0], [0], [0, 0, 1, 0], [], []>} : vector<128x256xf32>, vector<128x256xf32>, vector<128x128xf32> -> vector<128x128xf32>
    %6 = arith.addf %4, %5 : vector<128x128xf32>
    %c0_4 = arith.constant 0 : index
    %c0_5 = arith.constant 0 : index
    %7 = vector.load %arg2[%c0_4, %c0_5] : memref<128x128xf32, #tpu.memory_space<vmem>>, vector<128x128xf32>
    tpu.vector_store %arg2[%c0_4, %c0_5], %6 {strides = array<i32>} : memref<128x128xf32, #tpu.memory_space<vmem>>, vector<128x128xf32>,
    return
  }
  func.func @transform_0(%arg0: i32) -> (i32, i32) {
    %c0_i32 = arith.constant 0 : i32
    %c0_i32_0 = arith.constant 0 : i32
    return %c0_i32, %arg0 : i32, i32
  }
  func.func @transform_1(%arg0: i32) -> (i32, i32) {
    %c0_i32 = arith.constant 0 : i32
    %c0_i32_0 = arith.constant 0 : i32
    %c0_i32_1 = arith.constant 0 : i32
    return %c0_i32, %c0_i32_0 : i32, i32
  }
}

</mosaic_0001>

<llo_original>
// kernel: tpu_custom_call.1
$region0: #{tpu_custom_call.1}
  #allocation0 [shape = 'u32[]', space=smem, size = 0x4, offset = 0x4, fixed_abs, tag = 'smem constant byte address 0x4 - core index']
  #allocation1 [shape = 'u32[144,128]{1,0:T(1,128)}', space=vmem, size = 0x12000, scoped, tag = 'internal scratch']
  %s0 = inlined_call_operand.hbm [shape: f32[128,256], index: 0, kind: input, shape index: {}]
  %s1 = inlined_call_operand.hbm [shape: f32[128,128], index: 1, kind: output, shape index: {}]
  %s2 = sld [smem:[#allocation0]]
  $region22: #{tpu_custom_call.1} parent=0
    _
  %s4 = ssub.s32 1, %s2
  %s5 = scalar_select 0, %s4, %s2
  $region1: #{tpu_custom_call.1} parent=0
    #allocation2 [shape = 'u8[131072]{0}', space=vmem, size = 0x20000, scoped, tag = 'input window, operand 0, single buffered']
    #allocation3 [shape = 's32[1]{0}', space=sflag, size = 0x4, scoped, tag = 'scoped memory for tpu_custom_call.1']
    #allocation4 [shape = 's32[1]{0}', space=sflag, size = 0x4, scoped, tag = 'scoped memory for tpu_custom_call.1']
    #allocation5 [shape = 'u8[65536]{0}', space=vmem, size = 0x10000, scoped, tag = 'output window, operand 0, single buffered']
    %6 = vsyncpa [#allocation3], 0
    %7 = vsyncpa [#allocation4], 0
    // Predicated region
    $region2: #{tpu_custom_call.1} parent=1 // pred_check
      _
    $region3: #{tpu_custom_call.1} parent=1 // pred_check_branch
      %9 = sbr.rel (0) target = $region5
    $region4: #{tpu_custom_call.1} parent=1 // pred_region
      %s11 = ssub.s32 4096, 4096
      %12 = vsyncadd [#allocation3], %s11
      %s13 = sshll.u32 [#allocation2], 4
      %s14 = int_to_ptr.vmem [resolvable:$true] %s13
      %19 = dma.hbm_to_vmem [thread:$0]  %s0, 4096, %s14, [#allocation3], 256, 256, 16
    $region5: #{tpu_custom_call.1} parent=1 // pred_fallthru
      _
    // Predicated region
    $region6: #{tpu_custom_call.1} parent=1 // pred_check
      _
    $region7: #{tpu_custom_call.1} parent=1 // pred_check_branch
      %21 = sbr.rel (0) target = $region9
    $region8: #{tpu_custom_call.1} parent=1 // pred_region
      %22 = dma.done [#allocation3], 4096
    $region9: #{tpu_custom_call.1} parent=1 // pred_fallthru
      _
    %p23 = scmp.eq.s32.totalorder 0, 0
    // Predicated region
    $region10: #{tpu_custom_call.1} parent=1 // pred_check
      %p24 = pneg %p23
    $region11: #{tpu_custom_call.1} parent=1 // pred_check_branch
      %26 = sbr.rel (%p24) target = $region13
    $region12: #{tpu_custom_call.1} parent=1 // pred_region
      %27 = vst [vmem:[#allocation5] sm:$0xff] 0.0
      %28 = vst [vmem:[#allocation5 + $0x8] sm:$0xff] 0.0
      %29 = vst [vmem:[#allocation5 + $0x10] sm:$0xff] 0.0
      %30 = vst [vmem:[#allocation5 + $0x18] sm:$0xff] 0.0
      %31 = vst [vmem:[#allocation5 + $0x20] sm:$0xff] 0.0
      %32 = vst [vmem:[#allocation5 + $0x28] sm:$0xff] 0.0
      %33 = vst [vmem:[#allocation5 + $0x30] sm:$0xff] 0.0
      %34 = vst [vmem:[#allocation5 + $0x38] sm:$0xff] 0.0
      %35 = vst [vmem:[#allocation5 + $0x40] sm:$0xff] 0.0
      %36 = vst [vmem:[#allocation5 + $0x48] sm:$0xff] 0.0
      %37 = vst [vmem:[#allocation5 + $0x50] sm:$0xff] 0.0
      %38 = vst [vmem:[#allocation5 + $0x58] sm:$0xff] 0.0
      %39 = vst [vmem:[#allocation5 + $0x60] sm:$0xff] 0.0
      %40 = vst [vmem:[#allocation5 + $0x68] sm:$0xff] 0.0
      %41 = vst [vmem:[#allocation5 + $0x70] sm:$0xff] 0.0
      %42 = vst [vmem:[#allocation5 + $0x78] sm:$0xff] 0.0
    $region13: #{tpu_custom_call.1} parent=1 // pred_fallthru
      _
    %v43 = vld [vmem:[#allocation2] sm:$0xff]
    %v44 = vld [vmem:[#allocation2 + $0x8] sm:$0xff]
    %v45 = vld [vmem:[#allocation2 + $0x10] sm:$0xff]
    %v46 = vld [vmem:[#allocation2 + $0x18] sm:$0xff]
    %v47 = vld [vmem:[#allocation2 + $0x20] sm:$0xff]
    %v48 = vld [vmem:[#allocation2 + $0x28] sm:$0xff]
    %v49 = vld [vmem:[#allocation2 + $0x30] sm:$0xff]
    %v50 = vld [vmem:[#allocation2 + $0x38] sm:$0xff]
    %v51 = vld [vmem:[#allocation2 + $0x40] sm:$0xff]
    %v52 = vld [vmem:[#allocation2 + $0x48] sm:$0xff]
    %v53 = vld [vmem:[#allocation2 + $0x50] sm:$0xff]
    %v54 = vld [vmem:[#allocation2 + $0x58] sm:$0xff]
    %v55 = vld [vmem:[#allocation2 + $0x60] sm:$0xff]
    %v56 = vld [vmem:[#allocation2 + $0x68] sm:$0xff]
    %v57 = vld [vmem:[#allocation2 + $0x70] sm:$0xff]
    %v58 = vld [vmem:[#allocation2 + $0x78] sm:$0xff]
    %v59 = vld [vmem:[#allocation2 + $0x80] sm:$0xff]
    %v60 = vld [vmem:[#allocation2 + $0x88] sm:$0xff]
    %v61 = vld [vmem:[#allocation2 + $0x90] sm:$0xff]
    %v62 = vld [vmem:[#allocation2 + $0x98] sm:$0xff]
    %v63 = vld [vmem:[#allocation2 + $0xa0] sm:$0xff]
    %v64 = vld [vmem:[#allocation2 + $0xa8] sm:$0xff]
    %v65 = vld [vmem:[#allocation2 + $0xb0] sm:$0xff]
    %v66 = vld [vmem:[#allocation2 + $0xb8] sm:$0xff]
    %v67 = vld [vmem:[#allocation2 + $0xc0] sm:$0xff]
    %v68 = vld [vmem:[#allocation2 + $0xc8] sm:$0xff]
    %v69 = vld [vmem:[#allocation2 + $0xd0] sm:$0xff]
    %v70 = vld [vmem:[#allocation2 + $0xd8] sm:$0xff]
    %v71 = vld [vmem:[#allocation2 + $0xe0] sm:$0xff]
    %v72 = vld [vmem:[#allocation2 + $0xe8] sm:$0xff]
    %v73 = vld [vmem:[#allocation2 + $0xf0] sm:$0xff]
    %v74 = vld [vmem:[#allocation2 + $0xf8] sm:$0xff]
    %v75 = vld [vmem:[#allocation5] sm:$0xff]
    %v76 = vld [vmem:[#allocation5 + $0x8] sm:$0xff]
    %v77 = vld [vmem:[#allocation5 + $0x10] sm:$0xff]
    %v78 = vld [vmem:[#allocation5 + $0x18] sm:$0xff]
    %v79 = vld [vmem:[#allocation5 + $0x20] sm:$0xff]
    %v80 = vld [vmem:[#allocation5 + $0x28] sm:$0xff]
    %v81 = vld [vmem:[#allocation5 + $0x30] sm:$0xff]
    %v82 = vld [vmem:[#allocation5 + $0x38] sm:$0xff]
    %v83 = vld [vmem:[#allocation5 + $0x40] sm:$0xff]
    %v84 = vld [vmem:[#allocation5 + $0x48] sm:$0xff]
    %v85 = vld [vmem:[#allocation5 + $0x50] sm:$0xff]
    %v86 = vld [vmem:[#allocation5 + $0x58] sm:$0xff]
    %v87 = vld [vmem:[#allocation5 + $0x60] sm:$0xff]
    %v88 = vld [vmem:[#allocation5 + $0x68] sm:$0xff]
    %v89 = vld [vmem:[#allocation5 + $0x70] sm:$0xff]
    %v90 = vld [vmem:[#allocation5 + $0x78] sm:$0xff]
    %91 = vmatprep.subr.mxu0 %v44
    %92 = vmatpush1.xpose.msra.mxu0 %v43
    %93 = vmatprep.subr.mxu0 %v46
    %94 = vmatpush1.xpose.msra.mxu0 %v45
    %95 = vmatprep.subr.mxu0 %v48
    %96 = vmatpush1.xpose.msra.mxu0 %v47
    %97 = vmatprep.subr.mxu0 %v50
    %98 = vmatpush1.xpose.msra.mxu0 %v49
    %99 = vmatprep.subr.mxu0 %v52
    %100 = vmatpush1.xpose.msra.mxu0 %v51
    %101 = vmatprep.subr.mxu0 %v54
    %102 = vmatpush1.xpose.msra.mxu0 %v53
    %103 = vmatprep.subr.mxu0 %v56
    %104 = vmatpush1.xpose.msra.mxu0 %v55
    %105 = vmatprep.subr.mxu0 %v58
    %106 = vmatpush1.xpose.msra.mxu0 %v57
    %107 = vmatprep.subr.mxu0 %v60
    %108 = vmatpush1.xpose.msra.mxu0 %v59
    %109 = vmatprep.subr.mxu0 %v62
    %110 = vmatpush1.xpose.msra.mxu0 %v61
    %111 = vmatprep.subr.mxu0 %v64
    %112 = vmatpush1.xpose.msra.mxu0 %v63
    %113 = vmatprep.subr.mxu0 %v66
    %114 = vmatpush1.xpose.msra.mxu0 %v65
    %115 = vmatprep.subr.mxu0 %v68
    %116 = vmatpush1.xpose.msra.mxu0 %v67
    %117 = vmatprep.subr.mxu0 %v70
    %118 = vmatpush1.xpose.msra.mxu0 %v69
    %119 = vmatprep.subr.mxu0 %v72
    %120 = vmatpush1.xpose.msra.mxu0 %v71
    %121 = vmatprep.subr.mxu0 %v74
    %122 = vmatpush1.xpose.msra.mxu0 %v73
    %123 = vmatprep.subr.mxu0 0.0
    %124 = vmatpush1.xpose.msra.mxu0 0.0
    %125 = vmatprep.subr.mxu0 0.0
    %126 = vmatpush1.xpose.msra.mxu0 0.0
    %127 = vmatprep.subr.mxu0 0.0
    %128 = vmatpush1.xpose.msra.mxu0 0.0
    %129 = vmatprep.subr.mxu0 0.0
    %130 = vmatpush1.xpose.msra.mxu0 0.0
    %131 = vmatprep.subr.mxu0 0.0
    %132 = vmatpush1.xpose.msra.mxu0 0.0
    %133 = vmatprep.subr.mxu0 0.0
    %134 = vmatpush1.xpose.msra.mxu0 0.0
    %135 = vmatprep.subr.mxu0 0.0
    %136 = vmatpush1.xpose.msra.mxu0 0.0
    %137 = vmatprep.subr.mxu0 0.0
    %138 = vmatpush1.xpose.msra.mxu0 0.0
    %139 = vmatprep.subr.mxu0 0.0
    %140 = vmatpush1.xpose.msra.mxu0 0.0
    %141 = vmatprep.subr.mxu0 0.0
    %142 = vmatpush1.xpose.msra.mxu0 0.0
    %143 = vmatprep.subr.mxu0 0.0
    %144 = vmatpush1.xpose.msra.mxu0 0.0
    %145 = vmatprep.subr.mxu0 0.0
    %146 = vmatpush1.xpose.msra.mxu0 0.0
    %147 = vmatprep.subr.mxu0 0.0
    %148 = vmatpush1.xpose.msra.mxu0 0.0
    %149 = vmatprep.subr.mxu0 0.0
    %150 = vmatpush1.xpose.msra.mxu0 0.0
    %151 = vmatprep.subr.mxu0 0.0
    %152 = vmatpush1.xpose.msra.mxu0 0.0
    %153 = vmatprep.subr.mxu0 0.0
    %154 = vmatpush1.xpose.msra.mxu0 0.0
    %155 = vmatprep.mubr.f32.mxu0 %v44
    %156 = vmatmul.mubr.f32.gmra.mrb[0].mxu0 %v43
    %v157 = vpop.f32.mrb[0].mxu0
    %v158 = vadd.f32 0.0, %v157
    %v159 = vpop.f32.mrb[0].mxu0
    %160 = vmatprep.mubr.f32.mxu0 %v46
    %161 = vmatmul.mubr.f32.gmra.mrb[0].mxu0 %v45
    %v162 = vpop.f32.mrb[0].mxu0
    %v163 = vadd.f32 0.0, %v162
    %v164 = vpop.f32.mrb[0].mxu0
    %165 = vmatprep.mubr.f32.mxu0 %v48
    %166 = vmatmul.mubr.f32.gmra.mrb[0].mxu0 %v47
    %v167 = vpop.f32.mrb[0].mxu0
    %v168 = vadd.f32 0.0, %v167
    %v169 = vpop.f32.mrb[0].mxu0
    %170 = vmatprep.mubr.f32.mxu0 %v50
    %171 = vmatmul.mubr.f32.gmra.mrb[0].mxu0 %v49
    %v172 = vpop.f32.mrb[0].mxu0
    %v173 = vadd.f32 0.0, %v172
    %v174 = vpop.f32.mrb[0].mxu0
    %175 = vmatprep.mubr.f32.mxu0 %v52
    %176 = vmatmul.mubr.f32.gmra.mrb[0].mxu0 %v51
    %v177 = vpop.f32.mrb[0].mxu0
    %v178 = vadd.f32 0.0, %v177
    %v179 = vpop.f32.mrb[0].mxu0
    %180 = vmatprep.mubr.f32.mxu0 %v54
    %181 = vmatmul.mubr.f32.gmra.mrb[0].mxu0 %v53
    %v182 = vpop.f32.mrb[0].mxu0
    %v183 = vadd.f32 0.0, %v182
    %v184 = vpop.f32.mrb[0].mxu0
    %185 = vmatprep.mubr.f32.mxu0 %v56
    %186 = vmatmul.mubr.f32.gmra.mrb[0].mxu0 %v55
    %v187 = vpop.f32.mrb[0].mxu0
    %v188 = vadd.f32 0.0, %v187
    %v189 = vpop.f32.mrb[0].mxu0
    %190 = vmatprep.mubr.f32.mxu0 %v58
    %191 = vmatmul.mubr.f32.gmra.mrb[0].mxu0 %v57
    %v192 = vpop.f32.mrb[0].mxu0
    %v193 = vadd.f32 0.0, %v192
    %v194 = vpop.f32.mrb[0].mxu0
    %195 = vmatprep.mubr.f32.mxu0 %v60
    %196 = vmatmul.mubr.f32.gmra.mrb[0].mxu0 %v59
    %v197 = vpop.f32.mrb[0].mxu0
    %v198 = vadd.f32 0.0, %v197
    %v199 = vpop.f32.mrb[0].mxu0
    %200 = vmatprep.mubr.f32.mxu0 %v62
    %201 = vmatmul.mubr.f32.gmra.mrb[0].mxu0 %v61
    %v202 = vpop.f32.mrb[0].mxu0
    %v203 = vadd.f32 0.0, %v202
    %v204 = vpop.f32.mrb[0].mxu0
    %205 = vmatprep.mubr.f32.mxu0 %v64
    %206 = vmatmul.mubr.f32.gmra.mrb[0].mxu0 %v63
    %v207 = vpop.f32.mrb[0].mxu0
    %v208 = vadd.f32 0.0, %v207
    %v209 = vpop.f32.mrb[0].mxu0
    %210 = vmatprep.mubr.f32.mxu0 %v66
    %211 = vmatmul.mubr.f32.gmra.mrb[0].mxu0 %v65
    %v212 = vpop.f32.mrb[0].mxu0
    %v213 = vadd.f32 0.0, %v212
    %v214 = vpop.f32.mrb[0].mxu0
    %215 = vmatprep.mubr.f32.mxu0 %v68
    %216 = vmatmul.mubr.f32.gmra.mrb[0].mxu0 %v67
    %v217 = vpop.f32.mrb[0].mxu0
    %v218 = vadd.f32 0.0, %v217
    %v219 = vpop.f32.mrb[0].mxu0
    %220 = vmatprep.mubr.f32.mxu0 %v70
    %221 = vmatmul.mubr.f32.gmra.mrb[0].mxu0 %v69
    %v222 = vpop.f32.mrb[0].mxu0
    %v223 = vadd.f32 0.0, %v222
    %v224 = vpop.f32.mrb[0].mxu0
    %225 = vmatprep.mubr.f32.mxu0 %v72
    %226 = vmatmul.mubr.f32.gmra.mrb[0].mxu0 %v71
    %v227 = vpop.f32.mrb[0].mxu0
    %v228 = vadd.f32 0.0, %v227
    %v229 = vpop.f32.mrb[0].mxu0
    %230 = vmatprep.mubr.f32.mxu0 %v74
    %231 = vmatmul.mubr.f32.gmra.mrb[0].mxu0 %v73
    %v232 = vpop.f32.mrb[0].mxu0
    %v233 = vadd.f32 0.0, %v232
    %v234 = vpop.f32.mrb[0].mxu0
    %235 = vdwg.mxu0
    %v236 = vadd.f32 %v75, %v158
    %v237 = vadd.f32 %v76, %v163
    %v238 = vadd.f32 %v77, %v168
    %v239 = vadd.f32 %v78, %v173
    %v240 = vadd.f32 %v79, %v178
    %v241 = vadd.f32 %v80, %v183
    %v242 = vadd.f32 %v81, %v188
    %v243 = vadd.f32 %v82, %v193
    %v244 = vadd.f32 %v83, %v198
    %v245 = vadd.f32 %v84, %v203
    %v246 = vadd.f32 %v85, %v208
    %v247 = vadd.f32 %v86, %v213
    %v248 = vadd.f32 %v87, %v218
    %v249 = vadd.f32 %v88, %v223
    %v250 = vadd.f32 %v89, %v228
    %v251 = vadd.f32 %v90, %v233
    %252 = vst [vmem:[#allocation5] sm:$0xff] %v236
    %253 = vst [vmem:[#allocation5 + $0x8] sm:$0xff] %v237
    %254 = vst [vmem:[#allocation5 + $0x10] sm:$0xff] %v238
    %255 = vst [vmem:[#allocation5 + $0x18] sm:$0xff] %v239
    %256 = vst [vmem:[#allocation5 + $0x20] sm:$0xff] %v240
    %257 = vst [vmem:[#allocation5 + $0x28] sm:$0xff] %v241
    %258 = vst [vmem:[#allocation5 + $0x30] sm:$0xff] %v242
    %259 = vst [vmem:[#allocation5 + $0x38] sm:$0xff] %v243
    %260 = vst [vmem:[#allocation5 + $0x40] sm:$0xff] %v244
    %261 = vst [vmem:[#allocation5 + $0x48] sm:$0xff] %v245
    %262 = vst [vmem:[#allocation5 + $0x50] sm:$0xff] %v246
    %263 = vst [vmem:[#allocation5 + $0x58] sm:$0xff] %v247
    %264 = vst [vmem:[#allocation5 + $0x60] sm:$0xff] %v248
    %265 = vst [vmem:[#allocation5 + $0x68] sm:$0xff] %v249
    %266 = vst [vmem:[#allocation5 + $0x70] sm:$0xff] %v250
    %267 = vst [vmem:[#allocation5 + $0x78] sm:$0xff] %v251
    // Predicated region
    $region14: #{tpu_custom_call.1} parent=1 // pred_check
      _
    $region15: #{tpu_custom_call.1} parent=1 // pred_check_branch
      %269 = sbr.rel (0) target = $region17
    $region16: #{tpu_custom_call.1} parent=1 // pred_region
      %s271 = ssub.s32 2048, 2048
      %272 = vsyncadd [#allocation4], %s271
      %s273 = sshll.u32 [#allocation5], 4
      %s274 = int_to_ptr.vmem [resolvable:$true] %s273
      %279 = dma.vmem_to_hbm [thread:$0]  %s274, 2048, %s1, [#allocation4], 128, 128, 8
    $region17: #{tpu_custom_call.1} parent=1 // pred_fallthru
      _
    // Predicated region
    $region18: #{tpu_custom_call.1} parent=1 // pred_check
      _
    $region19: #{tpu_custom_call.1} parent=1 // pred_check_branch
      %281 = sbr.rel (0) target = $region21
    $region20: #{tpu_custom_call.1} parent=1 // pred_region
      %282 = dma.done [#allocation4], 2048
    $region21: #{tpu_custom_call.1} parent=1 // pred_fallthru
      _
    %283 = vsyncpa [#allocation3], 1
    %284 = vsyncpa [#allocation4], 1

</llo_original>
